<compile_context>
chip_gen: v7x
topology: tpu7x:2x2x1
jax: 0.10.0
libtpu: 0.0.40
codegen_flags: <defaults>
</compile_context>

<pallas_src>
import math

import jax
import jax.numpy as jnp
from jax.experimental import pallas as pl
from jax.experimental.pallas import tpu as pltpu


def data_embedding_kernel(x_ref, mark_ref, w_ref, o_ref):
    # x_ref:    (Bt, L, C)       values for Bt batch elements
    # mark_ref: (Bt, L, F)       int32 temporal indices, pre-offset into the fused table rows
    # w_ref:    (3C + T, D)      fused weight: [conv tap0; tap1; tap2; month; day; wday; hour; pad] (bf16)
    # o_ref:    (Bt, L, D)       output
    Bt, L, C = x_ref.shape
    F = mark_ref.shape[2]
    D = o_ref.shape[2]
    T = w_ref.shape[0] - 3 * C
    M = Bt * L

    x = x_ref[...].reshape(M, C)  # flatten batch*seq into the M (sublane) dim

    # Replicate-padded shifted windows, built in-kernel. (row % L) masks clamp at every
    # per-sequence edge so the roll never leaks rows across adjacent sequences in the block.
    pos = jax.lax.broadcasted_iota(jnp.int32, (M, C), 0) % L
    x_prev = jnp.where(pos == 0, x, pltpu.roll(x, shift=1, axis=0))          # x[l-1], edge clamped
    x_next = jnp.where(pos == L - 1, x, pltpu.roll(x, shift=M - 1, axis=0))  # x[l+1], edge clamped

    # One-hot temporal lookup block, built directly in bf16 (no zeros init).
    marks = mark_ref[...].reshape(M, F)
    col = jax.lax.broadcasted_iota(jnp.int32, (M, T), 1)
    hot = (col == marks[:, 0:1]).astype(jnp.bfloat16)
    for f in range(1, F):  # F = 4 temporal features, statically unrolled
        hot = hot + (col == marks[:, f:f + 1]).astype(jnp.bfloat16)

    # Single fused contraction on the MXU: conv (im2col) + temporal lookup in one dot.
    rows = jnp.concatenate(
        [x_prev.astype(jnp.bfloat16),
         x.astype(jnp.bfloat16),
         x_next.astype(jnp.bfloat16),
         hot],
        axis=1)                                                              # [M, 3C + T]
    acc = jnp.dot(rows, w_ref[...], preferred_element_type=jnp.float32)      # [M, D] f32 acc

    o_ref[...] = acc.reshape(Bt, L, D).astype(o_ref.dtype)


def _pick_block_batch(B, L, C, D, vmem_budget_bytes=12 << 20):
    """Largest Bt dividing B that keeps >=2 grid steps (megacore / pipelining) and fits VMEM."""
    if B <= 1:
        return 1
    best = 1
    for bt in range(1, B + 1):
        if B % bt:
            continue
        if bt > 1 and (L % 8):
            continue                      # keep the flatten a pure major-dim collapse
        if B // bt < 2:
            continue                      # keep >=2 grid steps so both v7x TCs get work
        work = 2 * (bt * L * (C + 4) * 4 + bt * L * D * 4)   # double-buffered in/out blocks
        if work <= vmem_budget_bytes:
            best = bt
    return best


def data_embedding_wo_pos(x, x_mark, conv_weight, conv_bias, temporal_tables):
    """x: [B, L, c_in] float32; x_mark: [B, L, 4] int (month, day, weekday, hour).

    conv_weight: torch layout [d_model, c_in, 3]; conv_bias: [d_model].
    temporal_tables: (month[13,D], day[32,D], weekday[7,D], hour[24,D]) fixed sinusoid tables.
    """
    B, L, C = x.shape
    D = conv_weight.shape[0]

    # Fused im2col weight: rows are [tap0 (x[l-1]) ; tap1 (x[l]) ; tap2 (x[l+1])].
    w_conv = jnp.transpose(conv_weight, (2, 1, 0)).reshape(3 * C, D)

    # Concatenated temporal table, conv bias folded into the month sub-table (exactly one
    # month row is selected per timestep, so the bias is added exactly once).
    month_t, day_t, weekday_t, hour_t = temporal_tables
    sizes = (month_t.shape[0], day_t.shape[0], weekday_t.shape[0], hour_t.shape[0])
    table = jnp.concatenate(
        [month_t + conv_bias[None, :], day_t, weekday_t, hour_t], axis=0)    # [76, D]

    # One resident fused weight [3C + T_pad, D]; pad total rows to a multiple of 8, cast bf16.
    rows_total = 3 * C + table.shape[0]
    pad = (-rows_total) % 8
    T_pad = table.shape[0] + pad
    fused_w = jnp.concatenate(
        [w_conv, table] + ([jnp.zeros((pad, D), table.dtype)] if pad else []), axis=0)
    fused_w = fused_w.astype(jnp.bfloat16)                                   # [3C + T_pad, D]

    # Offset each feature column into its sub-table so the kernel sees global table rows.
    offsets = jnp.array(
        [0, sizes[0], sizes[0] + sizes[1], sizes[0] + sizes[1] + sizes[2]], jnp.int32)
    mark_idx = x_mark.astype(jnp.int32) + offsets[None, None, :]             # [B, L, 4]

    Bt = _pick_block_batch(B, L, C, D)
    grid = (B // Bt,)

    cost = pl.CostEstimate(
        flops=2 * B * L * (3 * C + T_pad) * D,
        transcendentals=0,
        bytes_accessed=(x.size * 4 + mark_idx.size * 4 + fused_w.size * 2 + B * L * D * 4),
    )

    out = pl.pallas_call(
        data_embedding_kernel,
        out_shape=jax.ShapeDtypeStruct((B, L, D), x.dtype),
        grid_spec=pltpu.PrefetchScalarGridSpec(
            num_scalar_prefetch=0,
            grid=grid,  # parallel over batch blocks -> both TCs get work on v7x
            in_specs=[
                pl.BlockSpec((Bt, L, C), lambda b: (b, 0, 0)),
                pl.BlockSpec((Bt, L, 4), lambda b: (b, 0, 0)),
                pl.BlockSpec((3 * C + T_pad, D), lambda b: (0, 0)),  # resident fused weight
            ],
            out_specs=pl.BlockSpec((Bt, L, D), lambda b: (b, 0, 0)),
        ),
        compiler_params=pltpu.CompilerParams(dimension_semantics=("parallel",)),
        cost_estimate=cost,
    )(x, mark_idx, fused_w)
    return out


def fixed_embedding_table(c_in, d_model):
    """Matches FixedEmbedding.__init__: sin on even cols, cos on odd cols."""
    position = jnp.arange(c_in, dtype=jnp.float32)[:, None]
    div_term = jnp.exp(
        jnp.arange(0, d_model, 2, dtype=jnp.float32) * -(math.log(10000.0) / d_model)
    )
    w = jnp.zeros((c_in, d_model), jnp.float32)
    w = w.at[:, 0::2].set(jnp.sin(position * div_term))
    w = w.at[:, 1::2].set(jnp.cos(position * div_term))
    return w


if __name__ == "__main__":
    B, L, C_IN, D_MODEL = 2, 8, 4, 128  # freq='h' -> 4 temporal features

    key = jax.random.PRNGKey(0)
    kx, kmark, kw, kb = jax.random.split(key, 4)

    # inputs
    x = jax.random.normal(kx, (B, L, C_IN), dtype=jnp.float32)
    month = jax.random.randint(kmark, (B, L, 1), 0, 13)
    day = jax.random.randint(jax.random.fold_in(kmark, 1), (B, L, 1), 0, 32)
    weekday = jax.random.randint(jax.random.fold_in(kmark, 2), (B, L, 1), 0, 7)
    hour = jax.random.randint(jax.random.fold_in(kmark, 3), (B, L, 1), 0, 24)
    x_mark = jnp.concatenate([month, day, weekday, hour], axis=-1).astype(jnp.int32)

    # TokenEmbedding Conv1d params (kaiming_normal_, mode='fan_in', leaky_relu)
    fan_in = C_IN * 3
    gain = math.sqrt(2.0 / (1.0 + 0.01 ** 2))
    std = gain / math.sqrt(fan_in)
    conv_weight = jax.random.normal(kw, (D_MODEL, C_IN, 3), dtype=jnp.float32) * std
    bound = 1.0 / math.sqrt(fan_in)
    conv_bias = jax.random.uniform(kb, (D_MODEL,), jnp.float32, -bound, bound)

    # fixed temporal embedding tables (month=13, day=32, weekday=7, hour=24)
    temporal_tables = (
        fixed_embedding_table(13, D_MODEL),
        fixed_embedding_table(32, D_MODEL),
        fixed_embedding_table(7, D_MODEL),
        fixed_embedding_table(24, D_MODEL),
    )

    out = data_embedding_wo_pos(x, x_mark, conv_weight, conv_bias, temporal_tables)
    out = jax.block_until_ready(out)

    # pure-JAX reference with operands round-tripped through bf16 to match kernel precision
    def bf(a):
        return a.astype(jnp.bfloat16).astype(jnp.float32)

    xb = bf(x)
    xpad = jnp.concatenate([xb[:, :1, :], xb, xb[:, -1:, :]], axis=1)  # replicate pad
    taps = [bf(conv_weight[:, :, k].T) for k in range(3)]              # [C, D] per tap
    ref_conv = sum(
        jnp.einsum("blc,cd->bld", xpad[:, k:k + L, :], taps[k]) for k in range(3)
    )
    month_t, day_t, weekday_t, hour_t = temporal_tables
    month_b = bf(month_t + conv_bias[None, :])  # bias folded into month table, like kernel
    ref_temp = (
        jnp.take(bf(hour_t), x_mark[:, :, 3], axis=0)
        + jnp.take(bf(weekday_t), x_mark[:, :, 2], axis=0)
        + jnp.take(bf(day_t), x_mark[:, :, 1], axis=0)
        + jnp.take(month_b, x_mark[:, :, 0], axis=0)
    )
    ref = ref_conv + ref_temp

    assert out.shape == (B, L, D_MODEL)
    assert jnp.allclose(out, ref, atol=1e-2, rtol=1e-2)

    print("KERNEL_OK")
</pallas_src>

<mosaic_0001>
module attributes {stable_mosaic.version = 11 : i64} {
  func.func @data_embedding_kernel(%arg0: i32, %arg1: memref<1x8x4xf32, #tpu.memory_space<vmem>>, %arg2: memref<1x8x4xi32, #tpu.memory_space<vmem>>, %arg3: memref<88x128xbf16, #tpu.memory_space<vmem>>, %arg4: memref<1x8x128xf32, #tpu.memory_space<vmem>>) attributes {dimension_semantics = [#tpu.dimension_semantics<parallel>], iteration_bounds = array<i64: 2>, scalar_prefetch = 0 : i64, scratch_operands = 0 : i64, tpu.core_type = #tpu.core_type<tc>, window_params = [{transform_indices = @transform_0, window_bounds = array<i64: 1, 8, 4>}, {transform_indices = @transform_1, window_bounds = array<i64: 1, 8, 4>}, {pipeline_mode = #tpu.pipeline_mode<synchronous>, transform_indices = @transform_2, window_bounds = array<i64: 88, 128>}, {transform_indices = @transform_3, window_bounds = array<i64: 1, 8, 128>}]} {
    %c0 = arith.constant 0 : index
    %c0_0 = arith.constant 0 : index
    %c0_1 = arith.constant 0 : index
    %0 = vector.load %arg1[%c0, %c0_0, %c0_1] : memref<1x8x4xf32, #tpu.memory_space<vmem>>, vector<1x8x4xf32>
    %1 = vector.shape_cast %0 : vector<1x8x4xf32> to vector<8x4xf32>
    %2 = tpu.iota {dimensions = array<i32: 0>} : vector<8x4xi32>
    %c8_i32 = arith.constant 8 : i32
    %c0_i32 = arith.constant 0 : i32
    %3 = arith.cmpi eq, %c8_i32, %c0_i32 : i32
    %c1_i32 = arith.constant 1 : i32
    %4 = arith.select %3, %c1_i32, %c8_i32 : i32
    %5 = vector.broadcast %4 : i32 to vector<8x4xi32>
    %6 = arith.remsi %2, %5 : vector<8x4xi32>
    %c0_i32_2 = arith.constant 0 : i32
    %7 = vector.broadcast %c0_i32_2 : i32 to vector<8x4xi32>
    %8 = arith.cmpi ne, %6, %7 : vector<8x4xi32>
    %c0_i32_3 = arith.constant 0 : i32
    %9 = vector.broadcast %c0_i32_3 : i32 to vector<8x4xi32>
    %10 = arith.cmpi slt, %6, %9 : vector<8x4xi32>
    %c0_i32_4 = arith.constant 0 : i32
    %11 = arith.cmpi slt, %4, %c0_i32_4 : i32
    %12 = vector.broadcast %11 : i1 to vector<8x4xi1>
    %13 = vector.broadcast %12 : vector<8x4xi1> to vector<8x4xi1>
    %14 = arith.xori %10, %13 : vector<8x4xi1>
    %15 = arith.andi %14, %8 : vector<8x4xi1>
    %16 = vector.broadcast %4 : i32 to vector<8x4xi32>
    %17 = arith.addi %6, %16 : vector<8x4xi32>
    %18 = arith.select %15, %17, %6 : vector<8x4xi1>, vector<8x4xi32>
    %c0_i32_5 = arith.constant 0 : i32
    %19 = vector.broadcast %c0_i32_5 : i32 to vector<8x4xi32>
    %20 = arith.cmpi eq, %18, %19 : vector<8x4xi32>
    %c1_i32_6 = arith.constant 1 : i32
    %21 = tpu.dynamic_rotate %1 by %c1_i32_6 dim 0 : vector<8x4xf32>, i32 -> vector<8x4xf32>
    %22 = arith.select %20, %1, %21 : vector<8x4xi1>, vector<8x4xf32>
    %c7_i32 = arith.constant 7 : i32
    %23 = vector.broadcast %c7_i32 : i32 to vector<8x4xi32>
    %24 = arith.cmpi eq, %18, %23 : vector<8x4xi32>
    %c7_i32_7 = arith.constant 7 : i32
    %25 = tpu.dynamic_rotate %1 by %c7_i32_7 dim 0 : vector<8x4xf32>, i32 -> vector<8x4xf32>
    %26 = arith.select %24, %1, %25 : vector<8x4xi1>, vector<8x4xf32>
    %c0_8 = arith.constant 0 : index
    %c0_9 = arith.constant 0 : index
    %c0_10 = arith.constant 0 : index
    %27 = vector.load %arg2[%c0_8, %c0_9, %c0_10] : memref<1x8x4xi32, #tpu.memory_space<vmem>>, vector<1x8x4xi32>
    %28 = vector.shape_cast %27 : vector<1x8x4xi32> to vector<8x4xi32>
    %29 = tpu.iota {dimensions = array<i32: 1>} : vector<8x76xi32>
    %30 = vector.extract_strided_slice %28 {offsets = [0, 0], sizes = [8, 1], strides = [1, 1]} : vector<8x4xi32> to vector<8x1xi32>
    %31 = vector.broadcast %30 : vector<8x1xi32> to vector<8x76xi32>
    %32 = arith.cmpi eq, %29, %31 : vector<8x76xi32>
    %33 = arith.extui %32 : vector<8x76xi1> to vector<8x76xi32>
    %34 = arith.sitofp %33 : vector<8x76xi32> to vector<8x76xf32>
    %35 = arith.truncf %34 : vector<8x76xf32> to vector<8x76xbf16>
    %36 = vector.extract_strided_slice %28 {offsets = [0, 1], sizes = [8, 1], strides = [1, 1]} : vector<8x4xi32> to vector<8x1xi32>
    %37 = vector.broadcast %36 : vector<8x1xi32> to vector<8x76xi32>
    %38 = arith.cmpi eq, %29, %37 : vector<8x76xi32>
    %39 = arith.extui %38 : vector<8x76xi1> to vector<8x76xi32>
    %40 = arith.sitofp %39 : vector<8x76xi32> to vector<8x76xf32>
    %41 = arith.truncf %40 : vector<8x76xf32> to vector<8x76xbf16>
    %42 = arith.addf %35, %41 : vector<8x76xbf16>
    %43 = vector.extract_strided_slice %28 {offsets = [0, 2], sizes = [8, 1], strides = [1, 1]} : vector<8x4xi32> to vector<8x1xi32>
    %44 = vector.broadcast %43 : vector<8x1xi32> to vector<8x76xi32>
    %45 = arith.cmpi eq, %29, %44 : vector<8x76xi32>
    %46 = arith.extui %45 : vector<8x76xi1> to vector<8x76xi32>
    %47 = arith.sitofp %46 : vector<8x76xi32> to vector<8x76xf32>
    %48 = arith.truncf %47 : vector<8x76xf32> to vector<8x76xbf16>
    %49 = arith.addf %42, %48 : vector<8x76xbf16>
    %50 = vector.extract_strided_slice %28 {offsets = [0, 3], sizes = [8, 1], strides = [1, 1]} : vector<8x4xi32> to vector<8x1xi32>
    %51 = vector.broadcast %50 : vector<8x1xi32> to vector<8x76xi32>
    %52 = arith.cmpi eq, %29, %51 : vector<8x76xi32>
    %53 = arith.extui %52 : vector<8x76xi1> to vector<8x76xi32>
    %54 = arith.sitofp %53 : vector<8x76xi32> to vector<8x76xf32>
    %55 = arith.truncf %54 : vector<8x76xf32> to vector<8x76xbf16>
    %56 = arith.addf %49, %55 : vector<8x76xbf16>
    %57 = arith.truncf %22 : vector<8x4xf32> to vector<8x4xbf16>
    %58 = arith.truncf %1 : vector<8x4xf32> to vector<8x4xbf16>
    %59 = arith.truncf %26 : vector<8x4xf32> to vector<8x4xbf16>
    %60 = tpu.concatenate %57, %58, %59, %56 in 1 : vector<8x4xbf16>, vector<8x4xbf16>, vector<8x4xbf16>, vector<8x76xbf16> -> vector<8x88xbf16>
    %c0_11 = arith.constant 0 : index
    %c0_12 = arith.constant 0 : index
    %61 = vector.load %arg3[%c0_11, %c0_12] : memref<88x128xbf16, #tpu.memory_space<vmem>>, vector<88x128xbf16>
    %cst = arith.constant dense<0.000000e+00> : vector<8x128xf32>
    %62 = tpu.matmul %60, %61, %cst {dimension_numbers = #tpu.dot_dimension_numbers<[1], [0], [0], [1], [0, 0, 1, 1], [], []>} : vector<8x88xbf16>, vector<88x128xbf16>, vector<8x128xf32> -> vector<8x128xf32>
    %63 = vector.shape_cast %62 : vector<8x128xf32> to vector<1x8x128xf32>
    %c0_13 = arith.constant 0 : index
    %c0_14 = arith.constant 0 : index
    %c0_15 = arith.constant 0 : index
    %64 = vector.load %arg4[%c0_13, %c0_14, %c0_15] : memref<1x8x128xf32, #tpu.memory_space<vmem>>, vector<1x8x128xf32>
    tpu.vector_store %arg4[%c0_13, %c0_14, %c0_15], %63 {strides = array<i32>} : memref<1x8x128xf32, #tpu.memory_space<vmem>>, vector<1x8x128xf32>,
    return
  }
  func.func @transform_0(%arg0: i32) -> (i32, i32, i32) {
    %c0_i32 = arith.constant 0 : i32
    %c0_i32_0 = arith.constant 0 : i32
    %c0_i32_1 = arith.constant 0 : i32
    return %arg0, %c0_i32, %c0_i32_0 : i32, i32, i32
  }
  func.func @transform_1(%arg0: i32) -> (i32, i32, i32) {
    %c0_i32 = arith.constant 0 : i32
    %c0_i32_0 = arith.constant 0 : i32
    %c0_i32_1 = arith.constant 0 : i32
    return %arg0, %c0_i32, %c0_i32_0 : i32, i32, i32
  }
  func.func @transform_2(%arg0: i32) -> (i32, i32) {
    %c0_i32 = arith.constant 0 : i32
    %c0_i32_0 = arith.constant 0 : i32
    %c0_i32_1 = arith.constant 0 : i32
    return %c0_i32, %c0_i32_0 : i32, i32
  }
  func.func @transform_3(%arg0: i32) -> (i32, i32, i32) {
    %c0_i32 = arith.constant 0 : i32
    %c0_i32_0 = arith.constant 0 : i32
    %c0_i32_1 = arith.constant 0 : i32
    return %arg0, %c0_i32, %c0_i32_0 : i32, i32, i32
  }
}

</mosaic_0001>

<llo_original>
// kernel: tpu_custom_call.1
$region0: #{tpu_custom_call.1}
  #allocation0 [shape = 'u32[]', space=smem, size = 0x4, offset = 0x4, fixed_abs, tag = 'smem constant byte address 0x4 - core index']
  #allocation1 [shape = 'u32[144,128]{1,0:T(1,128)}', space=vmem, size = 0x12000, scoped, tag = 'internal scratch']
  %s0 = inlined_call_operand.vmem [shape: f32[2,8,4], index: 0, kind: input, shape index: {}]
  %s1 = inlined_call_operand.vmem [shape: s32[2,8,4], index: 1, kind: input, shape index: {}]
  %s2 = inlined_call_operand.vmem [shape: bf16[88,128], index: 2, kind: input, shape index: {}]
  %s3 = inlined_call_operand.hbm [shape: f32[2,8,128], index: 3, kind: output, shape index: {}]
  %s4 = sld [smem:[#allocation0]]
  $region45: #{tpu_custom_call.1} parent=0
    _
  %s6 = ssub.s32 1, %s4
  %s7 = scalar_select 0, %s6, %s4
  $region1: #{tpu_custom_call.1} parent=0
    #allocation2 [shape = 'u8[8192]{0}', space=vmem, size = 0x2000, scoped, tag = 'output window, operand 0']
    #allocation3 [shape = 's32[2]{0}', space=sflag, size = 0x8, scoped, tag = 'scoped memory for tpu_custom_call.1']
    %8 = vsyncpa [#allocation3], 0
    %s9 = scalar_lea.sflag [#allocation3], 1
    %10 = vsyncpa %s9, 0
    loop: start=0, step=1, limit=4
    $region2: #{tpu_custom_call.1} parent=1 // loop_pre_header
      _
    $region3: #{tpu_custom_call.1} parent=1 // loop_header
      %s12 = sphi 0, %s16
      %p13 = scmp.ge.s32.totalorder %s12, 4
      %s22 = sphi 0, %s24
      %s25 = sphi 0, %s22
      %s26 = sphi 0, %s25
      %s42 = sphi 0, %s26
      %s48 = sphi 0, %s50
      %s51 = sphi 0, %s48
      %s52 = sphi 0, %s51
      %s68 = sphi 0, %s52
      %s72 = sphi 0, %s72
      %s74 = sphi 0, %s72
      %s75 = sphi 0, %s74
      %s89 = sphi 0, %s75
      %s95 = sphi 0, %s97
      %s98 = sphi 0, %s95
      %s99 = sphi 0, %s98
      %s115 = sphi 0, %s99
    $region4: #{tpu_custom_call.1} parent=1 // loop_header_branch
      %15 = sbr.rel (%p13) target = $region8
    $region5: #{tpu_custom_call.1} parent=1 // loop_body
      %s17 = ssub.s32 %s12, 1
      %s18 = ssub.s32 %s12, 2
      %s19 = sadd.s32 %s12, 1
      %s20 = ssub.s32 %s12, %s19
      %p21 = scmp.eq.s32.totalorder %s20, 0
      %s23 = sadd.s32 %s22, 1
      %s24 = scalar_select %p21, %s22, %s23
      %p27 = pneg %p21
      %p28 = scmp.eq.s32.totalorder %s12, 1
      %p29 = por %p27, %p28
      %p30 = scmp.ne.s32.totalorder %s22, %s25
      %p31 = scmp.eq.s32.totalorder %s12, 0
      %p32 = por %p30, %p31
      %p33 = scmp.ne.s32.totalorder %s22, %s25
      %p34 = scmp.eq.s32.totalorder %s17, 1
      %p35 = por %p33, %p34
      %p36 = scmp.ne.s32.totalorder %s25, %s26
      %p37 = scmp.eq.s32.totalorder %s17, 0
      %p38 = por %p36, %p37
      %p39 = scmp.ne.s32.totalorder %s25, %s26
      %p40 = scmp.eq.s32.totalorder %s18, 1
      %p41 = por %p39, %p40
      %p43 = scmp.ne.s32.totalorder %s26, %s42
      %p44 = scmp.eq.s32.totalorder %s18, 0
      %p45 = por %p43, %p44
      %s46 = ssub.s32 %s12, %s19
      %p47 = scmp.eq.s32.totalorder %s46, 0
      %s49 = sadd.s32 %s48, 1
      %s50 = scalar_select %p47, %s48, %s49
      %p53 = pneg %p47
      %p54 = scmp.eq.s32.totalorder %s12, 1
      %p55 = por %p53, %p54
      %p56 = scmp.ne.s32.totalorder %s48, %s51
      %p57 = scmp.eq.s32.totalorder %s12, 0
      %p58 = por %p56, %p57
      %p59 = scmp.ne.s32.totalorder %s48, %s51
      %p60 = scmp.eq.s32.totalorder %s17, 1
      %p61 = por %p59, %p60
      %p62 = scmp.ne.s32.totalorder %s51, %s52
      %p63 = scmp.eq.s32.totalorder %s17, 0
      %p64 = por %p62, %p63
      %p65 = scmp.ne.s32.totalorder %s51, %s52
      %p66 = scmp.eq.s32.totalorder %s18, 1
      %p67 = por %p65, %p66
      %p69 = scmp.ne.s32.totalorder %s52, %s68
      %p70 = scmp.eq.s32.totalorder %s18, 0
      %p71 = por %p69, %p70
      %s73 = sadd.s32 %s72, 1
      %p76 = scmp.eq.s32.totalorder %s12, 1
      %p77 = scmp.ne.s32.totalorder %s72, %s74
      %p78 = scmp.eq.s32.totalorder %s12, 0
      %p79 = por %p77, %p78
      %p80 = scmp.ne.s32.totalorder %s72, %s74
      %p81 = scmp.eq.s32.totalorder %s17, 1
      %p82 = por %p80, %p81
      %p83 = scmp.ne.s32.totalorder %s74, %s75
      %p84 = scmp.eq.s32.totalorder %s17, 0
      %p85 = por %p83, %p84
      %p86 = scmp.ne.s32.totalorder %s74, %s75
      %p87 = scmp.eq.s32.totalorder %s18, 1
      %p88 = por %p86, %p87
      %p90 = scmp.ne.s32.totalorder %s75, %s89
      %p91 = scmp.eq.s32.totalorder %s18, 0
      %p92 = por %p90, %p91
      %s93 = ssub.s32 %s12, %s19
      %p94 = scmp.eq.s32.totalorder %s93, 0
      %s96 = sadd.s32 %s95, 1
      %s97 = scalar_select %p94, %s95, %s96
      %p100 = pneg %p94
      %p101 = scmp.eq.s32.totalorder %s12, 1
      %p102 = por %p100, %p101
      %p103 = scmp.ne.s32.totalorder %s95, %s98
      %p104 = scmp.eq.s32.totalorder %s12, 0
      %p105 = por %p103, %p104
      %p106 = scmp.ne.s32.totalorder %s95, %s98
      %p107 = scmp.eq.s32.totalorder %s17, 1
      %p108 = por %p106, %p107
      %p109 = scmp.ne.s32.totalorder %s98, %s99
      %p110 = scmp.eq.s32.totalorder %s17, 0
      %p111 = por %p109, %p110
      %p112 = scmp.ne.s32.totalorder %s98, %s99
      %p113 = scmp.eq.s32.totalorder %s18, 1
      %p114 = por %p112, %p113
      %p116 = scmp.ne.s32.totalorder %s99, %s115
      %p117 = scmp.eq.s32.totalorder %s18, 0
      %p118 = por %p116, %p117
      %p119 = scmp.le.s32.totalorder 1, %s12
      %p120 = scmp.lt.s32.totalorder %s12, 3
      %p121 = pnand %p119, %p120
      %p122 = pneg %p121
      // Predicated region
      $region9: #{tpu_custom_call.1} parent=5 // pred_check
        _
      $region10: #{tpu_custom_call.1} parent=5 // pred_check_branch
        %124 = sbr.rel (%p121) target = $region12
      $region11: #{tpu_custom_call.1} parent=5 // pred_region
        %s125 = ssub.s32 %s12, 1
        // Predicated region
        $region13: #{tpu_custom_call.1} parent=11 // pred_check
          %p126 = pneg %p85
        $region14: #{tpu_custom_call.1} parent=11 // pred_check_branch
          %128 = sbr.rel (%p126) target = $region16
        $region15: #{tpu_custom_call.1} parent=11 // pred_region
          _
        $region16: #{tpu_custom_call.1} parent=11 // pred_fallthru
          _
      $region12: #{tpu_custom_call.1} parent=5 // pred_fallthru
        _
      %p129 = scmp.lt.s32.totalorder %s12, 2
      // Predicated region
      $region17: #{tpu_custom_call.1} parent=5 // pred_check
        %p130 = pneg %p129
      $region18: #{tpu_custom_call.1} parent=5 // pred_check_branch
        %132 = sbr.rel (%p130) target = $region20
      $region19: #{tpu_custom_call.1} parent=5 // pred_region
        // Predicated region
        $region21: #{tpu_custom_call.1} parent=19 // pred_check
          %p133 = pneg %p32
        $region22: #{tpu_custom_call.1} parent=19 // pred_check_branch
          %135 = sbr.rel (%p133) target = $region24
        $region23: #{tpu_custom_call.1} parent=19 // pred_region
          %p136 = scmp.lt.s32.totalorder %s12, 1
          %s137 = scalar_select %p136, %s12, 1
          %s138 = smul.addr %s137, 8
          %s139 = scalar_lea.vmem %s0, %s138
        $region24: #{tpu_custom_call.1} parent=19 // pred_fallthru
          _
        // Predicated region
        $region25: #{tpu_custom_call.1} parent=19 // pred_check
          %p140 = pneg %p58
        $region26: #{tpu_custom_call.1} parent=19 // pred_check_branch
          %142 = sbr.rel (%p140) target = $region28
        $region27: #{tpu_custom_call.1} parent=19 // pred_region
          %p143 = scmp.lt.s32.totalorder %s12, 1
          %s144 = scalar_select %p143, %s12, 1
          %s145 = smul.addr %s144, 8
          %s146 = scalar_lea.vmem %s1, %s145
        $region28: #{tpu_custom_call.1} parent=19 // pred_fallthru
          _
      $region20: #{tpu_custom_call.1} parent=5 // pred_fallthru
        _
      %p147 = scmp.le.s32.totalorder 1, %s12
      %p148 = scmp.lt.s32.totalorder %s12, 3
      %p149 = pnand %p147, %p148
      %p150 = pneg %p149
      // Predicated region
      $region29: #{tpu_custom_call.1} parent=5 // pred_check
        _
      $region30: #{tpu_custom_call.1} parent=5 // pred_check_branch
        %152 = sbr.rel (%p149) target = $region32
      $region31: #{tpu_custom_call.1} parent=5 // pred_region
        %s153 = ssub.s32 %s12, 1
        %p154 = scmp.lt.s32.totalorder %s17, 1
        %s155 = scalar_select %p154, %s17, 1
        %s156 = smul.addr %s155, 8
        %s157 = scalar_lea.vmem %s0, %s156
        %p158 = pneg %p38
        %p159 = pneg %p35
        %p160 = scmp.lt.s32.totalorder %s17, 1
        %s161 = scalar_select %p160, %s17, 1
        %s162 = smul.addr %s161, 8
        %s163 = scalar_lea.vmem %s1, %s162
        %p164 = pneg %p64
        %p165 = pneg %p61
        %p166 = pneg %p85
        %p167 = pneg %p82
        %p168 = pneg %p111
        %p169 = pneg %p108
        %s170 = sand.u32 %s98, 1
        %s171 = scalar_lea.sflag [#allocation3], %s170
        %s172 = sand.u32 %s98, 1
        %s173 = smul.addr %s172, 8
        %s174 = scalar_lea.vmem [#allocation2], %s173
        %p175 = scmp.lt.s32.totalorder %s17, 1
        %s176 = scalar_select %p175, %s17, 1
        %s177 = smul.addr %s176, 8
        %s178 = scalar_lea.vmem %s0, %s177
        %p179 = scmp.lt.s32.totalorder %s17, 1
        %s180 = scalar_select %p179, %s17, 1
        %s181 = smul.addr %s180, 8
        %s182 = scalar_lea.vmem %s1, %s181
        %v184 = vld [vmem:[%s178] sm:$0xff]
        %v185 = vlaneseq
        %v186 = vshrl.u32 %v185, 7
        %vm187 = vcmp.lt.s32.totalorder %v186, 0
        %v188 = vsub.s32 0, %v186
        %v189 = vsel %vm187, %v188, %v186
        %v190 = vshrl.u32 %v189, 3
        %v191 = vand.u32 %v189, 7
        %v192 = vsub.s32 0, %v191
        %v193 = vsel %vm187, %v192, %v191
        %vm194 = vcmp.ne.s32.totalorder %v193, 0
        %vm195 = vcmp.lt.s32.totalorder %v193, 0
        %vm196 = vmand %vm195, %vm194
        %v197 = vadd.s32 %v193, 8
        %v198 = vsel %vm196, %v197, %v193
        %vm199 = vcmp.eq.s32.totalorder %v198, 0
        %v200 = vrot.slane %v184, 7
        %v201 = vsel %vm199, %v184, %v200
        %vm202 = vcmp.eq.s32.totalorder %v198, 7
        %v203 = vrot.slane %v184, 1
        %v204 = vsel %vm202, %v184, %v203
        %v205 = vld [vmem:[%s182] sm:$0xff]
        %v206 = vlaneseq
        %v207 = vand.u32 %v206, 127
        %208 = vset.pattern.permute.xlu0 0
        %209 = vperm.xlu0 %208, %v205
        %v210 = vpop.permute.xlu0 %209
        %vm211 = vcmp.eq.s32.totalorder %v207, %v210
        %v212 = vsel %vm211, 1, 0
        %v213 = vcvt.s32.f32 %v212
        %v214 = vpack.c.bf16 %v213, %v213
        %215 = vset.pattern.permute.xlu0 1
        %216 = vperm.xlu0 %215, %v205
        %v217 = vpop.permute.xlu0 %216
        %vm218 = vcmp.eq.s32.totalorder %v207, %v217
        %v219 = vsel %vm218, 1, 0
        %v220 = vcvt.s32.f32 %v219
        %v221 = vpack.c.bf16 %v220, %v220
        %v222 = vadd.bf16 %v214, %v221
        %223 = vset.pattern.permute.xlu0 2
        %224 = vperm.xlu0 %223, %v205
        %v225 = vpop.permute.xlu0 %224
        %vm226 = vcmp.eq.s32.totalorder %v207, %v225
        %v227 = vsel %vm226, 1, 0
        %v228 = vcvt.s32.f32 %v227
        %v229 = vpack.c.bf16 %v228, %v228
        %v230 = vadd.bf16 %v222, %v229
        %231 = vset.pattern.permute.xlu0 3
        %232 = vperm.xlu0 %231, %v205
        %v233 = vpop.permute.xlu0 %232
        %vm234 = vcmp.eq.s32.totalorder %v207, %v233
        %v235 = vsel %vm234, 1, 0
        %v236 = vcvt.s32.f32 %v235
        %v237 = vpack.c.bf16 %v236, %v236
        %v238 = vadd.bf16 %v230, %v237
        %v239 = vpack.c.bf16 %v201, %v201
        %v240 = vpack.c.bf16 %v184, %v184
        %v241 = vpack.c.bf16 %v204, %v204
        %243 = vrot.lane.b32.xlu0 %v240, 4
        %v244 = vpop.permute.xlu0 %243
        %246 = vrot.lane.b32.xlu0 %v241, 8
        %v247 = vpop.permute.xlu0 %246
        %249 = vrot.lane.b32.xlu0 %v238, 12
        %v250 = vpop.permute.xlu0 %249
        %vm251 = vcmask 31744
        %v254 = vsel %vm251, %v239, %v244
        %vm255 = vcmask 64512
        %v257 = vsel %vm255, %v254, %v247
        %vm258 = vcmask 97280
        %v260 = vsel %vm258, %v257, %v250
        %v261 = vld [vmem:[%s2] sm:$0xf]
        %v262 = vld [vmem:[%s2 + $0x4] sm:$0xf]
        %v263 = vld [vmem:[%s2 + $0x8] sm:$0xf]
        %v264 = vld [vmem:[%s2 + $0xc] sm:$0xf]
        %v265 = vld [vmem:[%s2 + $0x10] sm:$0xf]
        %v266 = vld [vmem:[%s2 + $0x14] sm:$0xf]
        %v267 = vld [vmem:[%s2 + $0x18] sm:$0xf]
        %v268 = vld [vmem:[%s2 + $0x1c] sm:$0xf]
        %v269 = vld [vmem:[%s2 + $0x20] sm:$0xf]
        %v270 = vld [vmem:[%s2 + $0x24] sm:$0xf]
        %v271 = vld [vmem:[%s2 + $0x28] sm:$0xf]
        %v283 = vunpack.c.l.b16 %v261
        %v284 = vunpack.c.l.b16 %v262
        %v285 = vunpack.c.l.b16 %v263
        %v286 = vunpack.c.l.b16 %v264
        %v287 = vunpack.c.l.b16 %v265
        %v288 = vunpack.c.l.b16 %v266
        %v289 = vunpack.c.l.b16 %v267
        %v290 = vunpack.c.l.b16 %v268
        %v291 = vunpack.c.l.b16 %v269
        %v292 = vunpack.c.l.b16 %v270
        %v293 = vunpack.c.l.b16 %v271
        %v294 = vpack.c.b16 %v284, %v283
        %v295 = vpack.c.b16 %v286, %v285
        %v296 = vpack.c.b16 %v288, %v287
        %v297 = vpack.c.b16 %v290, %v289
        %v298 = vpack.c.b16 %v292, %v291
        %v299 = vpack.c.b16 %v293, %v293
        %vm305 = vcmask 719872
        %v306 = vsel %vm305, %v260, 0
        %vm308 = vcmask 1043456
        %v310 = vsel %vm308, %v299, 0
        %312 = vmatprep.subr.bf16.mxu0 0
        %313 = vmatpush1.bf16.msra.mxu0 %v294
        %314 = vmatprep.subr.bf16.mxu0 0
        %315 = vmatpush1.bf16.msra.mxu0 %v295
        %316 = vmatprep.subr.bf16.mxu0 0
        %317 = vmatpush1.bf16.msra.mxu0 %v296
        %318 = vmatprep.subr.bf16.mxu0 0
        %319 = vmatpush1.bf16.msra.mxu0 %v297
        %320 = vmatprep.subr.bf16.mxu0 0
        %321 = vmatpush1.bf16.msra.mxu0 %v298
        %322 = vmatprep.subr.bf16.mxu0 0
        %323 = vmatpush1.bf16.msra.mxu0 %v310
        %324 = vmatprep.subr.bf16.mxu0 0
        %325 = vmatpush1.bf16.msra.mxu0 0
        %326 = vmatprep.subr.bf16.mxu0 0
        %327 = vmatpush1.bf16.msra.mxu0 0
        %328 = vmatprep.subr.bf16.mxu0 0
        %329 = vmatpush1.bf16.msra.mxu0 0
        %330 = vmatprep.subr.bf16.mxu0 0
        %331 = vmatpush1.bf16.msra.mxu0 0
        %332 = vmatprep.subr.bf16.mxu0 0
        %333 = vmatpush1.bf16.msra.mxu0 0
        %334 = vmatprep.subr.bf16.mxu0 0
        %335 = vmatpush1.bf16.msra.mxu0 0
        %336 = vmatprep.subr.bf16.mxu0 0
        %337 = vmatpush1.bf16.msra.mxu0 0
        %338 = vmatprep.subr.bf16.mxu0 0
        %339 = vmatpush1.bf16.msra.mxu0 0
        %340 = vmatprep.subr.bf16.mxu0 0
        %341 = vmatpush1.bf16.msra.mxu0 0
        %342 = vmatprep.subr.bf16.mxu0 0
        %343 = vmatpush1.bf16.msra.mxu0 0
        %344 = vmatprep.mubr.bf16.mxu0 0
        %345 = vmatmul.mubr.bf16.gmra.mrb[0].mxu0 %v306
        %v346 = vpop.f32.mrb[0].mxu0
        %v347 = vadd.f32 0.0, %v346
        %v348 = vpop.f32.mrb[0].mxu0
        %v349 = vpop.f32.mrb[0].mxu0
        %v350 = vpop.f32.mrb[0].mxu0
        %351 = vdwg.mxu0
        %352 = vst [vmem:[%s174] sm:$0xff] %v347
        %s353 = sand.u32 %s98, 1
        %s354 = scalar_lea.sflag [#allocation3], %s353
        %s355 = sand.u32 %s98, 1
        %s356 = smul.addr %s355, 8
        %s357 = scalar_lea.vmem [#allocation2], %s356
        // Predicated region
        $region33: #{tpu_custom_call.1} parent=31 // pred_check
          %p358 = pneg %p108
        $region34: #{tpu_custom_call.1} parent=31 // pred_check_branch
          %360 = sbr.rel (%p358) target = $region36
        $region35: #{tpu_custom_call.1} parent=31 // pred_region
          %s362 = ssub.s32 128, 128
          %363 = vsyncadd %s354, %s362
          %s364 = smul.addr %s17, 128
          %s365 = scalar_lea.hbm %s3, %s364
          %s367 = sshll.u32 %s357, 4
          %s368 = int_to_ptr.vmem [resolvable:$true] %s367
          %370 = dma.vmem_to_hbm [thread:$0]  %s368, 128, %s365, %s354
        $region36: #{tpu_custom_call.1} parent=31 // pred_fallthru
          _
      $region32: #{tpu_custom_call.1} parent=5 // pred_fallthru
        _
      %p371 = scmp.le.s32.totalorder 2, %s12
      // Predicated region
      $region37: #{tpu_custom_call.1} parent=5 // pred_check
        %p372 = pneg %p371
      $region38: #{tpu_custom_call.1} parent=5 // pred_check_branch
        %374 = sbr.rel (%p372) target = $region40
      $region39: #{tpu_custom_call.1} parent=5 // pred_region
        %s375 = ssub.s32 %s12, 2
        // Predicated region
        $region41: #{tpu_custom_call.1} parent=39 // pred_check
          %p376 = pneg %p114
        $region42: #{tpu_custom_call.1} parent=39 // pred_check_branch
          %378 = sbr.rel (%p376) target = $region44
        $region43: #{tpu_custom_call.1} parent=39 // pred_region
          %s379 = sand.u32 %s99, 1
          %s380 = scalar_lea.sflag [#allocation3], %s379
          %s381 = sand.u32 %s99, 1
          %s382 = smul.addr %s381, 8
          %s383 = scalar_lea.vmem [#allocation2], %s382
          %384 = dma.done %s380, 128
        $region44: #{tpu_custom_call.1} parent=39 // pred_fallthru
          _
      $region40: #{tpu_custom_call.1} parent=5 // pred_fallthru
        _
    $region6: #{tpu_custom_call.1} parent=1 // loop_footer
      %s16 = sadd.s32 1, %s12
    $region7: #{tpu_custom_call.1} parent=1 // loop_footer_branch
      %11 = sbr.rel target = $region3
    $region8: #{tpu_custom_call.1} parent=1 // loop_exit
      _
    %385 = vsyncpa [#allocation3], 1
    %s386 = scalar_lea.sflag [#allocation3], 1
    %387 = vsyncpa %s386, 1

</llo_original>
